<compile_context>
chip_gen: v7x
topology: tpu7x:2x2x1
jax: 0.10.0
libtpu: 0.0.40
codegen_flags: <defaults>
</compile_context>

<pallas_src>
import jax
import jax.numpy as jnp
from jax.experimental import pallas as pl
from jax.experimental.pallas import tpu as pltpu


def _round_up(x, m):
    return ((x + m - 1) // m) * m


def decoder_kernel(z_ref, w1_ref, b1_ref, w2_ref, b2_ref, out_ref):
    # Hidden layer: Linear (f32 MXU operands, f32 accumulate) + LeakyReLU(0.2).
    h = jnp.dot(z_ref[...], w1_ref[...], preferred_element_type=jnp.float32)
    h = h + b1_ref[...]                  # (1, hid_p) bias broadcasts over batch
    h = jnp.maximum(h, 0.2 * h)          # LeakyReLU(0.2) == max(x, 0.2x) for slope<1

    # Output layer: Linear + Sigmoid, stored directly at the unpadded width.
    o = jnp.dot(h, w2_ref[...], preferred_element_type=jnp.float32)
    o = o + b2_ref[...]                  # (1, out_dim) bias
    # sigmoid(x) == 0.5*tanh(0.5*x) + 0.5 -> single EUP transcendental, no divide.
    out_ref[...] = (0.5 * jnp.tanh(0.5 * o) + 0.5).astype(out_ref.dtype)


def prepare_params(w1, b1, w2, b2):
    """Pad / lay out weights ONCE (hoisted out of the per-forward path).

    w1:[latent,hid], b1:[1,hid] (or [hid]), w2:[hid,out], b2:[1,out] (or [out]).
    The hidden dim is zero-padded to a multiple of 128 (lane-dense, exact math);
    the output dim is left at its true width so the kernel writes no padding.
    """
    latent, hid = w1.shape
    hid_p = _round_up(hid, 128)
    w1_p = jnp.pad(w1.astype(jnp.float32), ((0, 0), (0, hid_p - hid)))
    b1_p = jnp.pad(jnp.reshape(b1, (1, -1)).astype(jnp.float32),
                   ((0, 0), (0, hid_p - hid)))
    w2_p = jnp.pad(w2.astype(jnp.float32), ((0, hid_p - hid), (0, 0)))
    b2_p = jnp.reshape(b2, (1, -1)).astype(jnp.float32)
    return (w1_p, b1_p, w2_p, b2_p)


def _pick_tile(B, target=1024):
    """Batch tile: single step for small B; for large B the largest tile that
    keeps batch-row padding under ~12.5% (bandwidth-bound => padded rows are
    pure wasted HBM writes)."""
    if B <= target:
        return _round_up(B, 8)
    for cand in (target, target // 2, target // 4):
        if (_round_up(B, cand) - B) * 8 <= B:
            return cand
    return 128


def decoder_forward(z, params, out_dtype=jnp.float32):
    """z:[B, latent] f32, params from prepare_params(). Returns [B, out_dim]."""
    w1_p, b1_p, w2_p, b2_p = params
    B, latent = z.shape
    hid_p = w1_p.shape[1]
    out_dim = w2_p.shape[1]

    tm = _pick_tile(B)
    Bp = _round_up(B, tm)
    z_p = z if Bp == B else jnp.pad(z, ((0, Bp - B), (0, 0)))

    out = pl.pallas_call(
        decoder_kernel,
        out_shape=jax.ShapeDtypeStruct((Bp, out_dim), out_dtype),
        grid=(Bp // tm,),
        in_specs=[
            pl.BlockSpec((tm, latent), lambda i: (i, 0)),       # z: tiled over batch
            pl.BlockSpec((latent, hid_p), lambda i: (0, 0)),    # w1: VMEM-resident
            pl.BlockSpec((1, hid_p), lambda i: (0, 0)),         # b1: VMEM-resident
            pl.BlockSpec((hid_p, out_dim), lambda i: (0, 0)),   # w2: VMEM-resident
            pl.BlockSpec((1, out_dim), lambda i: (0, 0)),       # b2: VMEM-resident
        ],
        out_specs=pl.BlockSpec((tm, out_dim), lambda i: (i, 0)),
        compiler_params=pltpu.CompilerParams(
            dimension_semantics=("parallel",),   # v7x: 2 TCs split the batch axis
            vmem_limit_bytes=48 << 20,           # headroom for tm=1024 f32 temporaries
        ),
    )(z_p, w1_p, b1_p, w2_p, b2_p)

    return out if Bp == B else out[:B]


def init_params(key, latent_dim, hid_dim, input_dim):
    """Deterministic init mimicking torch.nn.Linear (uniform +/- 1/sqrt(fan_in))."""
    k1, k2, k3, k4 = jax.random.split(key, 4)
    bound1 = 1.0 / jnp.sqrt(latent_dim)
    bound2 = 1.0 / jnp.sqrt(hid_dim)
    # Stored as [in, out] (transposed relative to PyTorch's [out, in]).
    w1 = jax.random.uniform(k1, (latent_dim, hid_dim), jnp.float32, -bound1, bound1)
    b1 = jax.random.uniform(k2, (1, hid_dim), jnp.float32, -bound1, bound1)
    w2 = jax.random.uniform(k3, (hid_dim, input_dim), jnp.float32, -bound2, bound2)
    b2 = jax.random.uniform(k4, (1, input_dim), jnp.float32, -bound2, bound2)
    return w1, b1, w2, b2


if __name__ == "__main__":
    # Shapes consistent with Decoder(dropout_prob=0.2, latent_dim=32,
    # BatchNorm=False, Dropout=False, input_dim=784, hid_dim=[64]).
    batch = 8
    latent_dim = 32
    hid_dim = 64
    input_dim = 784  # -> Sigmoid output head

    key = jax.random.PRNGKey(0)
    kz, kp = jax.random.split(key)
    z = jax.random.normal(kz, (batch, latent_dim), dtype=jnp.float32)
    w1, b1, w2, b2 = init_params(kp, latent_dim, hid_dim, input_dim)

    # Weight padding/casting done ONCE; per-call path only touches z.
    params = prepare_params(w1, b1, w2, b2)
    fwd = jax.jit(decoder_forward)

    x_hat = fwd(z, params)
    jax.block_until_ready(x_hat)

    # Pure-JAX f32 reference (kernel now uses f32 MXU operands -> tight parity).
    h_ref = z @ w1 + b1
    h_ref = jnp.where(h_ref >= 0.0, h_ref, 0.2 * h_ref)
    ref = jax.nn.sigmoid(h_ref @ w2 + b2)
    assert x_hat.shape == (batch, input_dim)
    assert bool(jnp.all(jnp.isfinite(x_hat)))
    err = float(jnp.max(jnp.abs(x_hat - ref)))
    assert err < 1e-4, err

    print("KERNEL_OK")
</pallas_src>

<mosaic_0001>
module attributes {stable_mosaic.version = 11 : i64} {
  func.func @decoder_kernel(%arg0: i32, %arg1: memref<8x32xf32, #tpu.memory_space<vmem>>, %arg2: memref<32x128xf32, #tpu.memory_space<vmem>>, %arg3: memref<1x128xf32, #tpu.memory_space<vmem>>, %arg4: memref<128x784xf32, #tpu.memory_space<vmem>>, %arg5: memref<1x784xf32, #tpu.memory_space<vmem>>, %arg6: memref<8x784xf32, #tpu.memory_space<vmem>>) attributes {dimension_semantics = [#tpu.dimension_semantics<parallel>], iteration_bounds = array<i64: 1>, scalar_prefetch = 0 : i64, scratch_operands = 0 : i64, tpu.core_type = #tpu.core_type<tc>, window_params = [{transform_indices = @transform_0, window_bounds = array<i64: 8, 32>}, {pipeline_mode = #tpu.pipeline_mode<synchronous>, transform_indices = @transform_1, window_bounds = array<i64: 32, 128>}, {pipeline_mode = #tpu.pipeline_mode<synchronous>, transform_indices = @transform_2, window_bounds = array<i64: 1, 128>}, {pipeline_mode = #tpu.pipeline_mode<synchronous>, transform_indices = @transform_3, window_bounds = array<i64: 128, 784>}, {pipeline_mode = #tpu.pipeline_mode<synchronous>, transform_indices = @transform_4, window_bounds = array<i64: 1, 784>}, {transform_indices = @transform_5, window_bounds = array<i64: 8, 784>}]} {
    %c0 = arith.constant 0 : index
    %c0_0 = arith.constant 0 : index
    %0 = vector.load %arg1[%c0, %c0_0] : memref<8x32xf32, #tpu.memory_space<vmem>>, vector<8x32xf32>
    %c0_1 = arith.constant 0 : index
    %c0_2 = arith.constant 0 : index
    %1 = vector.load %arg2[%c0_1, %c0_2] : memref<32x128xf32, #tpu.memory_space<vmem>>, vector<32x128xf32>
    %cst = arith.constant dense<0.000000e+00> : vector<8x128xf32>
    %2 = tpu.matmul %0, %1, %cst {dimension_numbers = #tpu.dot_dimension_numbers<[1], [0], [0], [1], [0, 0, 1, 1], [], []>} : vector<8x32xf32>, vector<32x128xf32>, vector<8x128xf32> -> vector<8x128xf32>
    %c0_3 = arith.constant 0 : index
    %c0_4 = arith.constant 0 : index
    %3 = vector.load %arg3[%c0_3, %c0_4] : memref<1x128xf32, #tpu.memory_space<vmem>>, vector<1x128xf32>
    %4 = vector.broadcast %3 : vector<1x128xf32> to vector<8x128xf32>
    %5 = arith.addf %2, %4 : vector<8x128xf32>
    %cst_5 = arith.constant 2.000000e-01 : f32
    %6 = vector.broadcast %cst_5 : f32 to vector<8x128xf32>
    %7 = arith.mulf %6, %5 : vector<8x128xf32>
    %8 = arith.maximumf %5, %7 : vector<8x128xf32>
    %c0_6 = arith.constant 0 : index
    %c0_7 = arith.constant 0 : index
    %9 = vector.load %arg4[%c0_6, %c0_7] : memref<128x784xf32, #tpu.memory_space<vmem>>, vector<128x784xf32>
    %cst_8 = arith.constant dense<0.000000e+00> : vector<8x784xf32>
    %10 = tpu.matmul %8, %9, %cst_8 {dimension_numbers = #tpu.dot_dimension_numbers<[1], [0], [0], [1], [0, 0, 1, 1], [], []>} : vector<8x128xf32>, vector<128x784xf32>, vector<8x784xf32> -> vector<8x784xf32>
    %c0_9 = arith.constant 0 : index
    %c0_10 = arith.constant 0 : index
    %11 = vector.load %arg5[%c0_9, %c0_10] : memref<1x784xf32, #tpu.memory_space<vmem>>, vector<1x784xf32>
    %12 = vector.broadcast %11 : vector<1x784xf32> to vector<8x784xf32>
    %13 = arith.addf %10, %12 : vector<8x784xf32>
    %cst_11 = arith.constant 5.000000e-01 : f32
    %14 = vector.broadcast %cst_11 : f32 to vector<8x784xf32>
    %15 = arith.mulf %14, %13 : vector<8x784xf32>
    %16 = math.tanh %15 : vector<8x784xf32>
    %cst_12 = arith.constant 5.000000e-01 : f32
    %17 = vector.broadcast %cst_12 : f32 to vector<8x784xf32>
    %18 = arith.mulf %17, %16 : vector<8x784xf32>
    %cst_13 = arith.constant 5.000000e-01 : f32
    %19 = vector.broadcast %cst_13 : f32 to vector<8x784xf32>
    %20 = arith.addf %18, %19 : vector<8x784xf32>
    %c0_14 = arith.constant 0 : index
    %c0_15 = arith.constant 0 : index
    %21 = vector.load %arg6[%c0_14, %c0_15] : memref<8x784xf32, #tpu.memory_space<vmem>>, vector<8x784xf32>
    tpu.vector_store %arg6[%c0_14, %c0_15], %20 {strides = array<i32>} : memref<8x784xf32, #tpu.memory_space<vmem>>, vector<8x784xf32>,
    return
  }
  func.func @transform_0(%arg0: i32) -> (i32, i32) {
    %c0_i32 = arith.constant 0 : i32
    %c0_i32_0 = arith.constant 0 : i32
    return %arg0, %c0_i32 : i32, i32
  }
  func.func @transform_1(%arg0: i32) -> (i32, i32) {
    %c0_i32 = arith.constant 0 : i32
    %c0_i32_0 = arith.constant 0 : i32
    %c0_i32_1 = arith.constant 0 : i32
    return %c0_i32, %c0_i32_0 : i32, i32
  }
  func.func @transform_2(%arg0: i32) -> (i32, i32) {
    %c0_i32 = arith.constant 0 : i32
    %c0_i32_0 = arith.constant 0 : i32
    %c0_i32_1 = arith.constant 0 : i32
    return %c0_i32, %c0_i32_0 : i32, i32
  }
  func.func @transform_3(%arg0: i32) -> (i32, i32) {
    %c0_i32 = arith.constant 0 : i32
    %c0_i32_0 = arith.constant 0 : i32
    %c0_i32_1 = arith.constant 0 : i32
    return %c0_i32, %c0_i32_0 : i32, i32
  }
  func.func @transform_4(%arg0: i32) -> (i32, i32) {
    %c0_i32 = arith.constant 0 : i32
    %c0_i32_0 = arith.constant 0 : i32
    %c0_i32_1 = arith.constant 0 : i32
    return %c0_i32, %c0_i32_0 : i32, i32
  }
  func.func @transform_5(%arg0: i32) -> (i32, i32) {
    %c0_i32 = arith.constant 0 : i32
    %c0_i32_0 = arith.constant 0 : i32
    return %arg0, %c0_i32 : i32, i32
  }
}

</mosaic_0001>

<llo_original>
// kernel: decoder_forward.1
$region0: #{decoder_forward.1}
  #allocation0 [shape = 'u32[]', space=smem, size = 0x4, offset = 0x4, fixed_abs, tag = 'smem constant byte address 0x4 - core index']
  #allocation1 [shape = 'u32[144,128]{1,0:T(1,128)}', space=vmem, size = 0x12000, scoped, tag = 'internal scratch']
  %s0 = inlined_call_operand.vmem [shape: f32[8,32], index: 0, kind: input, shape index: {}]
  %s1 = inlined_call_operand.vmem [shape: f32[32,128], index: 1, kind: input, shape index: {}]
  %s2 = inlined_call_operand.vmem [shape: f32[1,128], index: 2, kind: input, shape index: {}]
  %s3 = inlined_call_operand.vmem [shape: f32[128,784], index: 3, kind: input, shape index: {}]
  %s4 = inlined_call_operand.vmem [shape: f32[1,784], index: 4, kind: input, shape index: {}]
  %s5 = inlined_call_operand.hbm [shape: f32[8,784], index: 5, kind: output, shape index: {}]
  %s6 = sld [smem:[#allocation0]]
  $region30: #{decoder_forward.1} parent=0
    _
  %s8 = ssub.s32 1, %s6
  %s9 = scalar_select 0, %s8, %s6
  $region1: #{decoder_forward.1} parent=0
    #allocation2 [shape = 'u8[28672]{0}', space=vmem, size = 0x7000, scoped, tag = 'output window, operand 0, single buffered']
    #allocation3 [shape = 's32[1]{0}', space=sflag, size = 0x4, scoped, tag = 'scoped memory for decoder_forward.1']
    %10 = vsyncpa [#allocation3], 0
    // Predicated region
    $region2: #{decoder_forward.1} parent=1 // pred_check
      _
    $region3: #{decoder_forward.1} parent=1 // pred_check_branch
      %12 = sbr.rel (0) target = $region5
    $region4: #{decoder_forward.1} parent=1 // pred_region
      _
    $region5: #{decoder_forward.1} parent=1 // pred_fallthru
      _
    // Predicated region
    $region6: #{decoder_forward.1} parent=1 // pred_check
      _
    $region7: #{decoder_forward.1} parent=1 // pred_check_branch
      %14 = sbr.rel (0) target = $region9
    $region8: #{decoder_forward.1} parent=1 // pred_region
      _
    $region9: #{decoder_forward.1} parent=1 // pred_fallthru
      _
    // Predicated region
    $region10: #{decoder_forward.1} parent=1 // pred_check
      _
    $region11: #{decoder_forward.1} parent=1 // pred_check_branch
      %16 = sbr.rel (0) target = $region13
    $region12: #{decoder_forward.1} parent=1 // pred_region
      _
    $region13: #{decoder_forward.1} parent=1 // pred_fallthru
      _
    // Predicated region
    $region14: #{decoder_forward.1} parent=1 // pred_check
      _
    $region15: #{decoder_forward.1} parent=1 // pred_check_branch
      %18 = sbr.rel (0) target = $region17
    $region16: #{decoder_forward.1} parent=1 // pred_region
      _
    $region17: #{decoder_forward.1} parent=1 // pred_fallthru
      _
    // Predicated region
    $region18: #{decoder_forward.1} parent=1 // pred_check
      _
    $region19: #{decoder_forward.1} parent=1 // pred_check_branch
      %20 = sbr.rel (0) target = $region21
    $region20: #{decoder_forward.1} parent=1 // pred_region
      _
    $region21: #{decoder_forward.1} parent=1 // pred_fallthru
      _
    %v21 = vld [vmem:[%s0] sm:$0xff]
    %v22 = vld [vmem:[%s1] sm:$0xff]
    %v23 = vld [vmem:[%s1 + $0x8] sm:$0xff]
    %v24 = vld [vmem:[%s1 + $0x10] sm:$0xff]
    %v25 = vld [vmem:[%s1 + $0x18] sm:$0xff]
    %v26 = vld [vmem:[%s2] sm:$0x1]
    %v28 = vlaneseq
    %v29 = vshrl.u32 %v28, 7
    %v30 = vsub.s32 0, %v29
    %v31 = vrot.slane %v26, %v30
    %vm33 = vcmask 261120
    %v35 = vsel %vm33, %v21, 0
    %37 = vmatprep.subr.mxu0 0.0
    %38 = vmatpush1.msra.mxu0 %v22
    %39 = vmatprep.subr.mxu0 0.0
    %40 = vmatpush1.msra.mxu0 %v23
    %41 = vmatprep.subr.mxu0 0.0
    %42 = vmatpush1.msra.mxu0 %v24
    %43 = vmatprep.subr.mxu0 0.0
    %44 = vmatpush1.msra.mxu0 %v25
    %45 = vmatprep.subr.mxu0 0.0
    %46 = vmatpush1.msra.mxu0 0.0
    %47 = vmatprep.subr.mxu0 0.0
    %48 = vmatpush1.msra.mxu0 0.0
    %49 = vmatprep.subr.mxu0 0.0
    %50 = vmatpush1.msra.mxu0 0.0
    %51 = vmatprep.subr.mxu0 0.0
    %52 = vmatpush1.msra.mxu0 0.0
    %53 = vmatprep.subr.mxu0 0.0
    %54 = vmatpush1.msra.mxu0 0.0
    %55 = vmatprep.subr.mxu0 0.0
    %56 = vmatpush1.msra.mxu0 0.0
    %57 = vmatprep.subr.mxu0 0.0
    %58 = vmatpush1.msra.mxu0 0.0
    %59 = vmatprep.subr.mxu0 0.0
    %60 = vmatpush1.msra.mxu0 0.0
    %61 = vmatprep.subr.mxu0 0.0
    %62 = vmatpush1.msra.mxu0 0.0
    %63 = vmatprep.subr.mxu0 0.0
    %64 = vmatpush1.msra.mxu0 0.0
    %65 = vmatprep.subr.mxu0 0.0
    %66 = vmatpush1.msra.mxu0 0.0
    %67 = vmatprep.subr.mxu0 0.0
    %68 = vmatpush1.msra.mxu0 0.0
    %69 = vmatprep.subr.mxu0 0.0
    %70 = vmatpush1.msra.mxu0 0.0
    %71 = vmatprep.subr.mxu0 0.0
    %72 = vmatpush1.msra.mxu0 0.0
    %73 = vmatprep.subr.mxu0 0.0
    %74 = vmatpush1.msra.mxu0 0.0
    %75 = vmatprep.subr.mxu0 0.0
    %76 = vmatpush1.msra.mxu0 0.0
    %77 = vmatprep.subr.mxu0 0.0
    %78 = vmatpush1.msra.mxu0 0.0
    %79 = vmatprep.subr.mxu0 0.0
    %80 = vmatpush1.msra.mxu0 0.0
    %81 = vmatprep.subr.mxu0 0.0
    %82 = vmatpush1.msra.mxu0 0.0
    %83 = vmatprep.subr.mxu0 0.0
    %84 = vmatpush1.msra.mxu0 0.0
    %85 = vmatprep.subr.mxu0 0.0
    %86 = vmatpush1.msra.mxu0 0.0
    %87 = vmatprep.subr.mxu0 0.0
    %88 = vmatpush1.msra.mxu0 0.0
    %89 = vmatprep.subr.mxu0 0.0
    %90 = vmatpush1.msra.mxu0 0.0
    %91 = vmatprep.subr.mxu0 0.0
    %92 = vmatpush1.msra.mxu0 0.0
    %93 = vmatprep.subr.mxu0 0.0
    %94 = vmatpush1.msra.mxu0 0.0
    %95 = vmatprep.subr.mxu0 0.0
    %96 = vmatpush1.msra.mxu0 0.0
    %97 = vmatprep.subr.mxu0 0.0
    %98 = vmatpush1.msra.mxu0 0.0
    %99 = vmatprep.subr.mxu0 0.0
    %100 = vmatpush1.msra.mxu0 0.0
    %101 = vmatprep.mubr.f32.mxu0 0.0
    %102 = vmatmul.mubr.f32.gmra.mrb[0].mxu0 %v35
    %v103 = vpop.f32.mrb[0].mxu0
    %v104 = vadd.f32 %v31, %v103
    %v105 = vpop.f32.mrb[0].mxu0
    %106 = vdwg.mxu0
    %v107 = vmul.f32 %v104, 0.2
    %v108 = vmax.f32 %v104, %v107
    %v109 = vld [vmem:[%s3] sm:$0xff]
    %v110 = vld [vmem:[%s3 + $0x8] sm:$0xff]
    %v111 = vld [vmem:[%s3 + $0x10] sm:$0xff]
    %v112 = vld [vmem:[%s3 + $0x18] sm:$0xff]
    %v113 = vld [vmem:[%s3 + $0x20] sm:$0xff]
    %v114 = vld [vmem:[%s3 + $0x28] sm:$0xff]
    %v115 = vld [vmem:[%s3 + $0x30] sm:$0xff]
    %v116 = vld [vmem:[%s3 + $0x38] sm:$0xff]
    %v117 = vld [vmem:[%s3 + $0x40] sm:$0xff]
    %v118 = vld [vmem:[%s3 + $0x48] sm:$0xff]
    %v119 = vld [vmem:[%s3 + $0x50] sm:$0xff]
    %v120 = vld [vmem:[%s3 + $0x58] sm:$0xff]
    %v121 = vld [vmem:[%s3 + $0x60] sm:$0xff]
    %v122 = vld [vmem:[%s3 + $0x68] sm:$0xff]
    %v123 = vld [vmem:[%s3 + $0x70] sm:$0xff]
    %v124 = vld [vmem:[%s3 + $0x78] sm:$0xff]
    %v125 = vld [vmem:[%s3 + $0x80] sm:$0xff]
    %v126 = vld [vmem:[%s3 + $0x88] sm:$0xff]
    %v127 = vld [vmem:[%s3 + $0x90] sm:$0xff]
    %v128 = vld [vmem:[%s3 + $0x98] sm:$0xff]
    %v129 = vld [vmem:[%s3 + $0xa0] sm:$0xff]
    %v130 = vld [vmem:[%s3 + $0xa8] sm:$0xff]
    %v131 = vld [vmem:[%s3 + $0xb0] sm:$0xff]
    %v132 = vld [vmem:[%s3 + $0xb8] sm:$0xff]
    %v133 = vld [vmem:[%s3 + $0xc0] sm:$0xff]
    %v134 = vld [vmem:[%s3 + $0xc8] sm:$0xff]
    %v135 = vld [vmem:[%s3 + $0xd0] sm:$0xff]
    %v136 = vld [vmem:[%s3 + $0xd8] sm:$0xff]
    %v137 = vld [vmem:[%s3 + $0xe0] sm:$0xff]
    %v138 = vld [vmem:[%s3 + $0xe8] sm:$0xff]
    %v139 = vld [vmem:[%s3 + $0xf0] sm:$0xff]
    %v140 = vld [vmem:[%s3 + $0xf8] sm:$0xff]
    %v141 = vld [vmem:[%s3 + $0x100] sm:$0xff]
    %v142 = vld [vmem:[%s3 + $0x108] sm:$0xff]
    %v143 = vld [vmem:[%s3 + $0x110] sm:$0xff]
    %v144 = vld [vmem:[%s3 + $0x118] sm:$0xff]
    %v145 = vld [vmem:[%s3 + $0x120] sm:$0xff]
    %v146 = vld [vmem:[%s3 + $0x128] sm:$0xff]
    %v147 = vld [vmem:[%s3 + $0x130] sm:$0xff]
    %v148 = vld [vmem:[%s3 + $0x138] sm:$0xff]
    %v149 = vld [vmem:[%s3 + $0x140] sm:$0xff]
    %v150 = vld [vmem:[%s3 + $0x148] sm:$0xff]
    %v151 = vld [vmem:[%s3 + $0x150] sm:$0xff]
    %v152 = vld [vmem:[%s3 + $0x158] sm:$0xff]
    %v153 = vld [vmem:[%s3 + $0x160] sm:$0xff]
    %v154 = vld [vmem:[%s3 + $0x168] sm:$0xff]
    %v155 = vld [vmem:[%s3 + $0x170] sm:$0xff]
    %v156 = vld [vmem:[%s3 + $0x178] sm:$0xff]
    %v157 = vld [vmem:[%s3 + $0x180] sm:$0xff]
    %v158 = vld [vmem:[%s3 + $0x188] sm:$0xff]
    %v159 = vld [vmem:[%s3 + $0x190] sm:$0xff]
    %v160 = vld [vmem:[%s3 + $0x198] sm:$0xff]
    %v161 = vld [vmem:[%s3 + $0x1a0] sm:$0xff]
    %v162 = vld [vmem:[%s3 + $0x1a8] sm:$0xff]
    %v163 = vld [vmem:[%s3 + $0x1b0] sm:$0xff]
    %v164 = vld [vmem:[%s3 + $0x1b8] sm:$0xff]
    %v165 = vld [vmem:[%s3 + $0x1c0] sm:$0xff]
    %v166 = vld [vmem:[%s3 + $0x1c8] sm:$0xff]
    %v167 = vld [vmem:[%s3 + $0x1d0] sm:$0xff]
    %v168 = vld [vmem:[%s3 + $0x1d8] sm:$0xff]
    %v169 = vld [vmem:[%s3 + $0x1e0] sm:$0xff]
    %v170 = vld [vmem:[%s3 + $0x1e8] sm:$0xff]
    %v171 = vld [vmem:[%s3 + $0x1f0] sm:$0xff]
    %v172 = vld [vmem:[%s3 + $0x1f8] sm:$0xff]
    %v173 = vld [vmem:[%s3 + $0x200] sm:$0xff]
    %v174 = vld [vmem:[%s3 + $0x208] sm:$0xff]
    %v175 = vld [vmem:[%s3 + $0x210] sm:$0xff]
    %v176 = vld [vmem:[%s3 + $0x218] sm:$0xff]
    %v177 = vld [vmem:[%s3 + $0x220] sm:$0xff]
    %v178 = vld [vmem:[%s3 + $0x228] sm:$0xff]
    %v179 = vld [vmem:[%s3 + $0x230] sm:$0xff]
    %v180 = vld [vmem:[%s3 + $0x238] sm:$0xff]
    %v181 = vld [vmem:[%s3 + $0x240] sm:$0xff]
    %v182 = vld [vmem:[%s3 + $0x248] sm:$0xff]
    %v183 = vld [vmem:[%s3 + $0x250] sm:$0xff]
    %v184 = vld [vmem:[%s3 + $0x258] sm:$0xff]
    %v185 = vld [vmem:[%s3 + $0x260] sm:$0xff]
    %v186 = vld [vmem:[%s3 + $0x268] sm:$0xff]
    %v187 = vld [vmem:[%s3 + $0x270] sm:$0xff]
    %v188 = vld [vmem:[%s3 + $0x278] sm:$0xff]
    %v189 = vld [vmem:[%s3 + $0x280] sm:$0xff]
    %v190 = vld [vmem:[%s3 + $0x288] sm:$0xff]
    %v191 = vld [vmem:[%s3 + $0x290] sm:$0xff]
    %v192 = vld [vmem:[%s3 + $0x298] sm:$0xff]
    %v193 = vld [vmem:[%s3 + $0x2a0] sm:$0xff]
    %v194 = vld [vmem:[%s3 + $0x2a8] sm:$0xff]
    %v195 = vld [vmem:[%s3 + $0x2b0] sm:$0xff]
    %v196 = vld [vmem:[%s3 + $0x2b8] sm:$0xff]
    %v197 = vld [vmem:[%s3 + $0x2c0] sm:$0xff]
    %v198 = vld [vmem:[%s3 + $0x2c8] sm:$0xff]
    %v199 = vld [vmem:[%s3 + $0x2d0] sm:$0xff]
    %v200 = vld [vmem:[%s3 + $0x2d8] sm:$0xff]
    %v201 = vld [vmem:[%s3 + $0x2e0] sm:$0xff]
    %v202 = vld [vmem:[%s3 + $0x2e8] sm:$0xff]
    %v203 = vld [vmem:[%s3 + $0x2f0] sm:$0xff]
    %v204 = vld [vmem:[%s3 + $0x2f8] sm:$0xff]
    %v205 = vld [vmem:[%s3 + $0x300] sm:$0xff]
    %v206 = vld [vmem:[%s3 + $0x308] sm:$0xff]
    %v207 = vld [vmem:[%s3 + $0x310] sm:$0xff]
    %v208 = vld [vmem:[%s3 + $0x318] sm:$0xff]
    %v209 = vld [vmem:[%s3 + $0x320] sm:$0xff]
    %v210 = vld [vmem:[%s3 + $0x328] sm:$0xff]
    %v211 = vld [vmem:[%s3 + $0x330] sm:$0xff]
    %v212 = vld [vmem:[%s3 + $0x338] sm:$0xff]
    %v213 = vld [vmem:[%s3 + $0x340] sm:$0xff]
    %v214 = vld [vmem:[%s3 + $0x348] sm:$0xff]
    %v215 = vld [vmem:[%s3 + $0x350] sm:$0xff]
    %v216 = vld [vmem:[%s3 + $0x358] sm:$0xff]
    %v217 = vld [vmem:[%s3 + $0x360] sm:$0xff]
    %v218 = vld [vmem:[%s3 + $0x368] sm:$0xff]
    %v219 = vld [vmem:[%s3 + $0x370] sm:$0xff]
    %v220 = vld [vmem:[%s3 + $0x378] sm:$0xff]
    %v221 = vld [vmem:[%s4] sm:$0x7f]
    %v223 = vlaneseq
    %v224 = vshrl.u32 %v223, 7
    %v225 = vsub.s32 0, %v224
    %v226 = vrot.slane %v221, %v225
    %v227 = vlaneseq
    %v228 = vshrl.u32 %v227, 7
    %v229 = vsub.s32 1, %v228
    %v230 = vrot.slane %v221, %v229
    %v231 = vlaneseq
    %v232 = vshrl.u32 %v231, 7
    %v233 = vsub.s32 2, %v232
    %v234 = vrot.slane %v221, %v233
    %v235 = vlaneseq
    %v236 = vshrl.u32 %v235, 7
    %v237 = vsub.s32 3, %v236
    %v238 = vrot.slane %v221, %v237
    %v239 = vlaneseq
    %v240 = vshrl.u32 %v239, 7
    %v241 = vsub.s32 4, %v240
    %v242 = vrot.slane %v221, %v241
    %v243 = vlaneseq
    %v244 = vshrl.u32 %v243, 7
    %v245 = vsub.s32 5, %v244
    %v246 = vrot.slane %v221, %v245
    %v247 = vlaneseq
    %v248 = vshrl.u32 %v247, 7
    %v249 = vsub.s32 6, %v248
    %v250 = vrot.slane %v221, %v249
    %258 = vmatprep.subr.mxu0 %v110
    %259 = vmatpush1.msra.mxu0 %v109
    %260 = vmatprep.subr.mxu0 %v117
    %261 = vmatpush1.msra.mxu0 %v116
    %262 = vmatprep.subr.mxu0 %v124
    %263 = vmatpush1.msra.mxu0 %v123
    %264 = vmatprep.subr.mxu0 %v131
    %265 = vmatpush1.msra.mxu0 %v130
    %266 = vmatprep.subr.mxu0 %v138
    %267 = vmatpush1.msra.mxu0 %v137
    %268 = vmatprep.subr.mxu0 %v145
    %269 = vmatpush1.msra.mxu0 %v144
    %270 = vmatprep.subr.mxu0 %v152
    %271 = vmatpush1.msra.mxu0 %v151
    %272 = vmatprep.subr.mxu0 %v159
    %273 = vmatpush1.msra.mxu0 %v158
    %274 = vmatprep.subr.mxu0 %v166
    %275 = vmatpush1.msra.mxu0 %v165
    %276 = vmatprep.subr.mxu0 %v173
    %277 = vmatpush1.msra.mxu0 %v172
    %278 = vmatprep.subr.mxu0 %v180
    %279 = vmatpush1.msra.mxu0 %v179
    %280 = vmatprep.subr.mxu0 %v187
    %281 = vmatpush1.msra.mxu0 %v186
    %282 = vmatprep.subr.mxu0 %v194
    %283 = vmatpush1.msra.mxu0 %v193
    %284 = vmatprep.subr.mxu0 %v201
    %285 = vmatpush1.msra.mxu0 %v200
    %286 = vmatprep.subr.mxu0 %v208
    %287 = vmatpush1.msra.mxu0 %v207
    %288 = vmatprep.subr.mxu0 %v215
    %289 = vmatpush1.msra.mxu0 %v214
    %290 = vmatprep.subr.mxu0 0.0
    %291 = vmatpush1.msra.mxu0 0.0
    %292 = vmatprep.subr.mxu0 0.0
    %293 = vmatpush1.msra.mxu0 0.0
    %294 = vmatprep.subr.mxu0 0.0
    %295 = vmatpush1.msra.mxu0 0.0
    %296 = vmatprep.subr.mxu0 0.0
    %297 = vmatpush1.msra.mxu0 0.0
    %298 = vmatprep.subr.mxu0 0.0
    %299 = vmatpush1.msra.mxu0 0.0
    %300 = vmatprep.subr.mxu0 0.0
    %301 = vmatpush1.msra.mxu0 0.0
    %302 = vmatprep.subr.mxu0 0.0
    %303 = vmatpush1.msra.mxu0 0.0
    %304 = vmatprep.subr.mxu0 0.0
    %305 = vmatpush1.msra.mxu0 0.0
    %306 = vmatprep.subr.mxu0 0.0
    %307 = vmatpush1.msra.mxu0 0.0
    %308 = vmatprep.subr.mxu0 0.0
    %309 = vmatpush1.msra.mxu0 0.0
    %310 = vmatprep.subr.mxu0 0.0
    %311 = vmatpush1.msra.mxu0 0.0
    %312 = vmatprep.subr.mxu0 0.0
    %313 = vmatpush1.msra.mxu0 0.0
    %314 = vmatprep.subr.mxu0 0.0
    %315 = vmatpush1.msra.mxu0 0.0
    %316 = vmatprep.subr.mxu0 0.0
    %317 = vmatpush1.msra.mxu0 0.0
    %318 = vmatprep.subr.mxu0 0.0
    %319 = vmatpush1.msra.mxu0 0.0
    %320 = vmatprep.subr.mxu0 0.0
    %321 = vmatpush1.msra.mxu0 0.0
    %322 = vmatprep.mubr.f32.mxu0 0.0
    %323 = vmatmul.mubr.f32.gmra.mrb[0].mxu0 %v108
    %v324 = vpop.f32.mrb[0].mxu0
    %v325 = vadd.f32 %v226, %v324
    %v326 = vpop.f32.mrb[0].mxu0
    %v327 = vadd.f32 %v230, %v326
    %328 = vdwg.mxu0
    %329 = vmatprep.subr.mxu0 %v112
    %330 = vmatpush1.msra.mxu0 %v111
    %331 = vmatprep.subr.mxu0 %v119
    %332 = vmatpush1.msra.mxu0 %v118
    %333 = vmatprep.subr.mxu0 %v126
    %334 = vmatpush1.msra.mxu0 %v125
    %335 = vmatprep.subr.mxu0 %v133
    %336 = vmatpush1.msra.mxu0 %v132
    %337 = vmatprep.subr.mxu0 %v140
    %338 = vmatpush1.msra.mxu0 %v139
    %339 = vmatprep.subr.mxu0 %v147
    %340 = vmatpush1.msra.mxu0 %v146
    %341 = vmatprep.subr.mxu0 %v154
    %342 = vmatpush1.msra.mxu0 %v153
    %343 = vmatprep.subr.mxu0 %v161
    %344 = vmatpush1.msra.mxu0 %v160
    %345 = vmatprep.subr.mxu0 %v168
    %346 = vmatpush1.msra.mxu0 %v167
    %347 = vmatprep.subr.mxu0 %v175
    %348 = vmatpush1.msra.mxu0 %v174
    %349 = vmatprep.subr.mxu0 %v182
    %350 = vmatpush1.msra.mxu0 %v181
    %351 = vmatprep.subr.mxu0 %v189
    %352 = vmatpush1.msra.mxu0 %v188
    %353 = vmatprep.subr.mxu0 %v196
    %354 = vmatpush1.msra.mxu0 %v195
    %355 = vmatprep.subr.mxu0 %v203
    %356 = vmatpush1.msra.mxu0 %v202
    %357 = vmatprep.subr.mxu0 %v210
    %358 = vmatpush1.msra.mxu0 %v209
    %359 = vmatprep.subr.mxu0 %v217
    %360 = vmatpush1.msra.mxu0 %v216
    %361 = vmatprep.subr.mxu0 0.0
    %362 = vmatpush1.msra.mxu0 0.0
    %363 = vmatprep.subr.mxu0 0.0
    %364 = vmatpush1.msra.mxu0 0.0
    %365 = vmatprep.subr.mxu0 0.0
    %366 = vmatpush1.msra.mxu0 0.0
    %367 = vmatprep.subr.mxu0 0.0
    %368 = vmatpush1.msra.mxu0 0.0
    %369 = vmatprep.subr.mxu0 0.0
    %370 = vmatpush1.msra.mxu0 0.0
    %371 = vmatprep.subr.mxu0 0.0
    %372 = vmatpush1.msra.mxu0 0.0
    %373 = vmatprep.subr.mxu0 0.0
    %374 = vmatpush1.msra.mxu0 0.0
    %375 = vmatprep.subr.mxu0 0.0
    %376 = vmatpush1.msra.mxu0 0.0
    %377 = vmatprep.subr.mxu0 0.0
    %378 = vmatpush1.msra.mxu0 0.0
    %379 = vmatprep.subr.mxu0 0.0
    %380 = vmatpush1.msra.mxu0 0.0
    %381 = vmatprep.subr.mxu0 0.0
    %382 = vmatpush1.msra.mxu0 0.0
    %383 = vmatprep.subr.mxu0 0.0
    %384 = vmatpush1.msra.mxu0 0.0
    %385 = vmatprep.subr.mxu0 0.0
    %386 = vmatpush1.msra.mxu0 0.0
    %387 = vmatprep.subr.mxu0 0.0
    %388 = vmatpush1.msra.mxu0 0.0
    %389 = vmatprep.subr.mxu0 0.0
    %390 = vmatpush1.msra.mxu0 0.0
    %391 = vmatprep.subr.mxu0 0.0
    %392 = vmatpush1.msra.mxu0 0.0
    %393 = vmatprep.mubr.f32.mxu0 0.0
    %394 = vmatmul.mubr.f32.gmra.mrb[0].mxu0 %v108
    %v395 = vpop.f32.mrb[0].mxu0
    %v396 = vadd.f32 %v234, %v395
    %v397 = vpop.f32.mrb[0].mxu0
    %v398 = vadd.f32 %v238, %v397
    %399 = vdwg.mxu0
    %400 = vmatprep.subr.mxu0 %v114
    %401 = vmatpush1.msra.mxu0 %v113
    %402 = vmatprep.subr.mxu0 %v121
    %403 = vmatpush1.msra.mxu0 %v120
    %404 = vmatprep.subr.mxu0 %v128
    %405 = vmatpush1.msra.mxu0 %v127
    %406 = vmatprep.subr.mxu0 %v135
    %407 = vmatpush1.msra.mxu0 %v134
    %408 = vmatprep.subr.mxu0 %v142
    %409 = vmatpush1.msra.mxu0 %v141
    %410 = vmatprep.subr.mxu0 %v149
    %411 = vmatpush1.msra.mxu0 %v148
    %412 = vmatprep.subr.mxu0 %v156
    %413 = vmatpush1.msra.mxu0 %v155
    %414 = vmatprep.subr.mxu0 %v163
    %415 = vmatpush1.msra.mxu0 %v162
    %416 = vmatprep.subr.mxu0 %v170
    %417 = vmatpush1.msra.mxu0 %v169
    %418 = vmatprep.subr.mxu0 %v177
    %419 = vmatpush1.msra.mxu0 %v176
    %420 = vmatprep.subr.mxu0 %v184
    %421 = vmatpush1.msra.mxu0 %v183
    %422 = vmatprep.subr.mxu0 %v191
    %423 = vmatpush1.msra.mxu0 %v190
    %424 = vmatprep.subr.mxu0 %v198
    %425 = vmatpush1.msra.mxu0 %v197
    %426 = vmatprep.subr.mxu0 %v205
    %427 = vmatpush1.msra.mxu0 %v204
    %428 = vmatprep.subr.mxu0 %v212
    %429 = vmatpush1.msra.mxu0 %v211
    %430 = vmatprep.subr.mxu0 %v219
    %431 = vmatpush1.msra.mxu0 %v218
    %432 = vmatprep.subr.mxu0 0.0
    %433 = vmatpush1.msra.mxu0 0.0
    %434 = vmatprep.subr.mxu0 0.0
    %435 = vmatpush1.msra.mxu0 0.0
    %436 = vmatprep.subr.mxu0 0.0
    %437 = vmatpush1.msra.mxu0 0.0
    %438 = vmatprep.subr.mxu0 0.0
    %439 = vmatpush1.msra.mxu0 0.0
    %440 = vmatprep.subr.mxu0 0.0
    %441 = vmatpush1.msra.mxu0 0.0
    %442 = vmatprep.subr.mxu0 0.0
    %443 = vmatpush1.msra.mxu0 0.0
    %444 = vmatprep.subr.mxu0 0.0
    %445 = vmatpush1.msra.mxu0 0.0
    %446 = vmatprep.subr.mxu0 0.0
    %447 = vmatpush1.msra.mxu0 0.0
    %448 = vmatprep.subr.mxu0 0.0
    %449 = vmatpush1.msra.mxu0 0.0
    %450 = vmatprep.subr.mxu0 0.0
    %451 = vmatpush1.msra.mxu0 0.0
    %452 = vmatprep.subr.mxu0 0.0
    %453 = vmatpush1.msra.mxu0 0.0
    %454 = vmatprep.subr.mxu0 0.0
    %455 = vmatpush1.msra.mxu0 0.0
    %456 = vmatprep.subr.mxu0 0.0
    %457 = vmatpush1.msra.mxu0 0.0
    %458 = vmatprep.subr.mxu0 0.0
    %459 = vmatpush1.msra.mxu0 0.0
    %460 = vmatprep.subr.mxu0 0.0
    %461 = vmatpush1.msra.mxu0 0.0
    %462 = vmatprep.subr.mxu0 0.0
    %463 = vmatpush1.msra.mxu0 0.0
    %464 = vmatprep.mubr.f32.mxu0 0.0
    %465 = vmatmul.mubr.f32.gmra.mrb[0].mxu0 %v108
    %v466 = vpop.f32.mrb[0].mxu0
    %v467 = vadd.f32 %v242, %v466
    %v468 = vpop.f32.mrb[0].mxu0
    %v469 = vadd.f32 %v246, %v468
    %470 = vdwg.mxu0
    %471 = vmatprep.subr.mxu0 0.0
    %472 = vmatpush1.msra.mxu0 %v115
    %473 = vmatprep.subr.mxu0 0.0
    %474 = vmatpush1.msra.mxu0 %v122
    %475 = vmatprep.subr.mxu0 0.0
    %476 = vmatpush1.msra.mxu0 %v129
    %477 = vmatprep.subr.mxu0 0.0
    %478 = vmatpush1.msra.mxu0 %v136
    %479 = vmatprep.subr.mxu0 0.0
    %480 = vmatpush1.msra.mxu0 %v143
    %481 = vmatprep.subr.mxu0 0.0
    %482 = vmatpush1.msra.mxu0 %v150
    %483 = vmatprep.subr.mxu0 0.0
    %484 = vmatpush1.msra.mxu0 %v157
    %485 = vmatprep.subr.mxu0 0.0
    %486 = vmatpush1.msra.mxu0 %v164
    %487 = vmatprep.subr.mxu0 0.0
    %488 = vmatpush1.msra.mxu0 %v171
    %489 = vmatprep.subr.mxu0 0.0
    %490 = vmatpush1.msra.mxu0 %v178
    %491 = vmatprep.subr.mxu0 0.0
    %492 = vmatpush1.msra.mxu0 %v185
    %493 = vmatprep.subr.mxu0 0.0
    %494 = vmatpush1.msra.mxu0 %v192
    %495 = vmatprep.subr.mxu0 0.0
    %496 = vmatpush1.msra.mxu0 %v199
    %497 = vmatprep.subr.mxu0 0.0
    %498 = vmatpush1.msra.mxu0 %v206
    %499 = vmatprep.subr.mxu0 0.0
    %500 = vmatpush1.msra.mxu0 %v213
    %501 = vmatprep.subr.mxu0 0.0
    %502 = vmatpush1.msra.mxu0 %v220
    %503 = vmatprep.subr.mxu0 0.0
    %504 = vmatpush1.msra.mxu0 0.0
    %505 = vmatprep.subr.mxu0 0.0
    %506 = vmatpush1.msra.mxu0 0.0
    %507 = vmatprep.subr.mxu0 0.0
    %508 = vmatpush1.msra.mxu0 0.0
    %509 = vmatprep.subr.mxu0 0.0
    %510 = vmatpush1.msra.mxu0 0.0
    %511 = vmatprep.subr.mxu0 0.0
    %512 = vmatpush1.msra.mxu0 0.0
    %513 = vmatprep.subr.mxu0 0.0
    %514 = vmatpush1.msra.mxu0 0.0
    %515 = vmatprep.subr.mxu0 0.0
    %516 = vmatpush1.msra.mxu0 0.0
    %517 = vmatprep.subr.mxu0 0.0
    %518 = vmatpush1.msra.mxu0 0.0
    %519 = vmatprep.subr.mxu0 0.0
    %520 = vmatpush1.msra.mxu0 0.0
    %521 = vmatprep.subr.mxu0 0.0
    %522 = vmatpush1.msra.mxu0 0.0
    %523 = vmatprep.subr.mxu0 0.0
    %524 = vmatpush1.msra.mxu0 0.0
    %525 = vmatprep.subr.mxu0 0.0
    %526 = vmatpush1.msra.mxu0 0.0
    %527 = vmatprep.subr.mxu0 0.0
    %528 = vmatpush1.msra.mxu0 0.0
    %529 = vmatprep.subr.mxu0 0.0
    %530 = vmatpush1.msra.mxu0 0.0
    %531 = vmatprep.subr.mxu0 0.0
    %532 = vmatpush1.msra.mxu0 0.0
    %533 = vmatprep.subr.mxu0 0.0
    %534 = vmatpush1.msra.mxu0 0.0
    %535 = vmatprep.mubr.f32.mxu0 0.0
    %536 = vmatmul.mubr.f32.gmra.mrb[0].mxu0 %v108
    %v537 = vpop.f32.mrb[0].mxu0
    %v538 = vadd.f32 %v250, %v537
    %v539 = vpop.f32.mrb[0].mxu0
    %540 = vdwg.mxu0
    %v541 = vmul.f32 %v325, 0.5
    %v542 = vmul.f32 %v327, 0.5
    %v543 = vmul.f32 %v396, 0.5
    %v544 = vmul.f32 %v398, 0.5
    %v545 = vmul.f32 %v467, 0.5
    %v546 = vmul.f32 %v469, 0.5
    %v547 = vmul.f32 %v538, 0.5
    %v548 = vtanh.pop %v541
    %v549 = vtanh.pop %v542
    %v550 = vtanh.pop %v543
    %v551 = vtanh.pop %v544
    %v552 = vtanh.pop %v545
    %v553 = vtanh.pop %v546
    %v554 = vtanh.pop %v547
    %v555 = vmul.f32 %v548, 0.5
    %v556 = vmul.f32 %v549, 0.5
    %v557 = vmul.f32 %v550, 0.5
    %v558 = vmul.f32 %v551, 0.5
    %v559 = vmul.f32 %v552, 0.5
    %v560 = vmul.f32 %v553, 0.5
    %v561 = vmul.f32 %v554, 0.5
    %v562 = vadd.f32 %v555, 0.5
    %v563 = vadd.f32 %v556, 0.5
    %v564 = vadd.f32 %v557, 0.5
    %v565 = vadd.f32 %v558, 0.5
    %v566 = vadd.f32 %v559, 0.5
    %v567 = vadd.f32 %v560, 0.5
    %v568 = vadd.f32 %v561, 0.5
    %569 = vst [vmem:[#allocation2] sm:$0xff] %v562
    %570 = vst [vmem:[#allocation2 + $0x8] sm:$0xff] %v563
    %571 = vst [vmem:[#allocation2 + $0x10] sm:$0xff] %v564
    %572 = vst [vmem:[#allocation2 + $0x18] sm:$0xff] %v565
    %573 = vst [vmem:[#allocation2 + $0x20] sm:$0xff] %v566
    %574 = vst [vmem:[#allocation2 + $0x28] sm:$0xff] %v567
    %vm575 = vcmask 130048
    %576 = vst.msk [vmem:[#allocation2 + $0x30] sm:$0xff] %vm575, %v568
    // Predicated region
    $region22: #{decoder_forward.1} parent=1 // pred_check
      _
    $region23: #{decoder_forward.1} parent=1 // pred_check_branch
      %578 = sbr.rel (0) target = $region25
    $region24: #{decoder_forward.1} parent=1 // pred_region
      %s580 = ssub.s32 896, 896
      %581 = vsyncadd [#allocation3], %s580
      %s583 = sshll.u32 [#allocation2], 4
      %s584 = int_to_ptr.vmem [resolvable:$true] %s583
      %586 = dma.vmem_to_hbm [thread:$0]  %s584, 896, %s5, [#allocation3]
    $region25: #{decoder_forward.1} parent=1 // pred_fallthru
      _
    // Predicated region
    $region26: #{decoder_forward.1} parent=1 // pred_check
      _
    $region27: #{decoder_forward.1} parent=1 // pred_check_branch
      %588 = sbr.rel (0) target = $region29
    $region28: #{decoder_forward.1} parent=1 // pred_region
      %589 = dma.done [#allocation3], 896
    $region29: #{decoder_forward.1} parent=1 // pred_fallthru
      _
    %590 = vsyncpa [#allocation3], 1

</llo_original>
